<compile_context>
chip_gen: v7x
topology: tpu7x:2x2x1
jax: 0.10.0
libtpu: 0.0.40
codegen_flags: <defaults>
</compile_context>

<pallas_src>
import functools

import jax
import jax.numpy as jnp
import numpy as np
from jax.experimental import pallas as pl
from jax.experimental.pallas import tpu as pltpu


def _compose_kernel(x_ref, w1_ref, b1_ref, w2_ref, b2_ref,
                    first_ref, second_ref, h_scr):
    # ---- first: Linear  h = x @ W1 + b1  (f32 MXU accumulation) -------------
    h = jnp.dot(x_ref[...], w1_ref[...], preferred_element_type=jnp.float32)
    h = h + b1_ref[...].astype(jnp.float32)       # bias broadcast over rows
    h_scr[...] = h                                # keep h resident in VMEM (f32)
    first_ref[...] = h.astype(first_ref.dtype)    # intermediate output (first_out)

    # ---- second: Gate  y = silu(h @ W2 + b2) --------------------------------
    lhs = h_scr[...].astype(w2_ref.dtype)         # feed MXU from the VMEM scratch
    z = jnp.dot(lhs, w2_ref[...], preferred_element_type=jnp.float32)
    z = z + b2_ref[...].astype(jnp.float32)
    y = z * jax.nn.sigmoid(z)                     # SiLU in f32 (EUP)
    second_ref[...] = y.astype(second_ref.dtype)


@functools.partial(jax.jit, static_argnames=("tm",))
def custom_compose(x, w1, b1, w2, b2, *, tm=64):
    """Fused CustomCompose forward. Returns (second_out, first_out)."""
    n, d_in = x.shape
    d_hidden = w1.shape[1]
    d_out = w2.shape[1]
    assert n % tm == 0 and tm % 8 == 0, "row tile must divide N and be a multiple of 8"
    assert d_in % 128 == 0 and d_hidden % 128 == 0 and d_out % 128 == 0, \
        "feature dims must be lane-aligned (multiples of 128)"

    b1_2d = b1.reshape(1, d_hidden)
    b2_2d = b2.reshape(1, d_out)

    grid = (n // tm,)

    # Rough VMEM budget: streamed x / outputs are double-buffered, weights resident,
    # plus the f32 scratch for h.  Clamp to 64 MiB so the same config fits v7x.
    bpe = jnp.dtype(x.dtype).itemsize
    est = (2 * tm * d_in * bpe            # x tiles (double buffered)
           + 2 * tm * d_hidden * bpe      # first_out tiles
           + 2 * tm * d_out * bpe         # second_out tiles
           + d_in * d_hidden * bpe        # W1 (resident)
           + d_hidden * d_out * bpe       # W2 (resident)
           + (d_hidden + d_out) * bpe     # biases
           + tm * d_hidden * 4)           # f32 scratch for h
    vmem_limit = int(min(max(2 * est, 32 * 1024 * 1024), 64 * 1024 * 1024))

    grid_spec = pltpu.PrefetchScalarGridSpec(
        num_scalar_prefetch=0,
        grid=grid,
        in_specs=[
            pl.BlockSpec((tm, d_in), lambda i: (i, 0)),          # x: streamed row tiles
            pl.BlockSpec((d_in, d_hidden), lambda i: (0, 0)),    # W1: VMEM resident
            pl.BlockSpec((1, d_hidden), lambda i: (0, 0)),       # b1: VMEM resident
            pl.BlockSpec((d_hidden, d_out), lambda i: (0, 0)),   # W2: VMEM resident
            pl.BlockSpec((1, d_out), lambda i: (0, 0)),          # b2: VMEM resident
        ],
        out_specs=[
            pl.BlockSpec((tm, d_hidden), lambda i: (i, 0)),      # first_out
            pl.BlockSpec((tm, d_out), lambda i: (i, 0)),         # second_out
        ],
        scratch_shapes=[pltpu.VMEM((tm, d_hidden), jnp.float32)],
    )

    first_out, second_out = pl.pallas_call(
        _compose_kernel,
        out_shape=(jax.ShapeDtypeStruct((n, d_hidden), x.dtype),
                   jax.ShapeDtypeStruct((n, d_out), x.dtype)),
        grid_spec=grid_spec,
        compiler_params=pltpu.CompilerParams(
            dimension_semantics=("parallel",),   # row tiles shard across TCs on v7x
            vmem_limit_bytes=vmem_limit,
        ),
    )(x, w1, b1_2d, w2, b2_2d)
    return second_out, first_out


def _reference(x, w1, b1, w2, b2):
    h = jnp.dot(x.astype(jnp.float32), w1.astype(jnp.float32)) + b1.astype(jnp.float32)
    z = jnp.dot(h, w2.astype(jnp.float32)) + b2.astype(jnp.float32)
    y = z * jax.nn.sigmoid(z)
    return y.astype(x.dtype), h.astype(x.dtype)


if __name__ == "__main__":
    # Small, tile-friendly shapes: 128 nodes, features 128 -> 256 -> 128.
    N, D_IN, D_HID, D_OUT = 128, 128, 256, 128
    key = jax.random.PRNGKey(0)
    kx, kw1, kb1, kw2, kb2 = jax.random.split(key, 5)
    x = jax.random.normal(kx, (N, D_IN), dtype=jnp.float32)
    w1 = jax.random.normal(kw1, (D_IN, D_HID), dtype=jnp.float32) / np.sqrt(D_IN)
    b1 = jax.random.normal(kb1, (D_HID,), dtype=jnp.float32) * 0.1
    w2 = jax.random.normal(kw2, (D_HID, D_OUT), dtype=jnp.float32) / np.sqrt(D_HID)
    b2 = jax.random.normal(kb2, (D_OUT,), dtype=jnp.float32) * 0.1

    second_out, first_out = custom_compose(x, w1, b1, w2, b2, tm=64)
    jax.block_until_ready((second_out, first_out))

    ref_second, ref_first = _reference(x, w1, b1, w2, b2)
    np.testing.assert_allclose(np.asarray(first_out), np.asarray(ref_first),
                               rtol=2e-5, atol=2e-5)
    np.testing.assert_allclose(np.asarray(second_out), np.asarray(ref_second),
                               rtol=2e-5, atol=2e-5)
    print("KERNEL_OK")
</pallas_src>

<mosaic_0001>
module attributes {stable_mosaic.version = 11 : i64} {
  func.func @_compose_kernel(%arg0: i32, %arg1: memref<64x128xf32, #tpu.memory_space<vmem>>, %arg2: memref<128x256xf32, #tpu.memory_space<vmem>>, %arg3: memref<1x256xf32, #tpu.memory_space<vmem>>, %arg4: memref<256x128xf32, #tpu.memory_space<vmem>>, %arg5: memref<1x128xf32, #tpu.memory_space<vmem>>, %arg6: memref<64x256xf32, #tpu.memory_space<vmem>>, %arg7: memref<64x128xf32, #tpu.memory_space<vmem>>, %arg8: memref<64x256xf32, #tpu.memory_space<vmem>>) attributes {dimension_semantics = [#tpu.dimension_semantics<parallel>], iteration_bounds = array<i64: 2>, scalar_prefetch = 0 : i64, scratch_operands = 1 : i64, tpu.core_type = #tpu.core_type<tc>, window_params = [{transform_indices = @transform_0, window_bounds = array<i64: 64, 128>}, {pipeline_mode = #tpu.pipeline_mode<synchronous>, transform_indices = @transform_1, window_bounds = array<i64: 128, 256>}, {pipeline_mode = #tpu.pipeline_mode<synchronous>, transform_indices = @transform_2, window_bounds = array<i64: 1, 256>}, {pipeline_mode = #tpu.pipeline_mode<synchronous>, transform_indices = @transform_3, window_bounds = array<i64: 256, 128>}, {pipeline_mode = #tpu.pipeline_mode<synchronous>, transform_indices = @transform_4, window_bounds = array<i64: 1, 128>}, {transform_indices = @transform_5, window_bounds = array<i64: 64, 256>}, {transform_indices = @transform_6, window_bounds = array<i64: 64, 128>}]} {
    %c0 = arith.constant 0 : index
    %c0_0 = arith.constant 0 : index
    %0 = vector.load %arg1[%c0, %c0_0] : memref<64x128xf32, #tpu.memory_space<vmem>>, vector<64x128xf32>
    %c0_1 = arith.constant 0 : index
    %c0_2 = arith.constant 0 : index
    %1 = vector.load %arg2[%c0_1, %c0_2] : memref<128x256xf32, #tpu.memory_space<vmem>>, vector<128x256xf32>
    %cst = arith.constant dense<0.000000e+00> : vector<64x256xf32>
    %2 = tpu.matmul %0, %1, %cst {dimension_numbers = #tpu.dot_dimension_numbers<[1], [0], [0], [1], [0, 0, 1, 1], [], []>} : vector<64x128xf32>, vector<128x256xf32>, vector<64x256xf32> -> vector<64x256xf32>
    %c0_3 = arith.constant 0 : index
    %c0_4 = arith.constant 0 : index
    %3 = vector.load %arg3[%c0_3, %c0_4] : memref<1x256xf32, #tpu.memory_space<vmem>>, vector<1x256xf32>
    %4 = vector.broadcast %3 : vector<1x256xf32> to vector<64x256xf32>
    %5 = arith.addf %2, %4 : vector<64x256xf32>
    %c0_5 = arith.constant 0 : index
    %c0_6 = arith.constant 0 : index
    %6 = vector.load %arg8[%c0_5, %c0_6] : memref<64x256xf32, #tpu.memory_space<vmem>>, vector<64x256xf32>
    tpu.vector_store %arg8[%c0_5, %c0_6], %5 {strides = array<i32>} : memref<64x256xf32, #tpu.memory_space<vmem>>, vector<64x256xf32>,
    %c0_7 = arith.constant 0 : index
    %c0_8 = arith.constant 0 : index
    %7 = vector.load %arg6[%c0_7, %c0_8] : memref<64x256xf32, #tpu.memory_space<vmem>>, vector<64x256xf32>
    tpu.vector_store %arg6[%c0_7, %c0_8], %5 {strides = array<i32>} : memref<64x256xf32, #tpu.memory_space<vmem>>, vector<64x256xf32>,
    %c0_9 = arith.constant 0 : index
    %c0_10 = arith.constant 0 : index
    %8 = vector.load %arg8[%c0_9, %c0_10] : memref<64x256xf32, #tpu.memory_space<vmem>>, vector<64x256xf32>
    %c0_11 = arith.constant 0 : index
    %c0_12 = arith.constant 0 : index
    %9 = vector.load %arg4[%c0_11, %c0_12] : memref<256x128xf32, #tpu.memory_space<vmem>>, vector<256x128xf32>
    %cst_13 = arith.constant dense<0.000000e+00> : vector<64x128xf32>
    %10 = tpu.matmul %8, %9, %cst_13 {dimension_numbers = #tpu.dot_dimension_numbers<[1], [0], [0], [1], [0, 0, 1, 1], [], []>} : vector<64x256xf32>, vector<256x128xf32>, vector<64x128xf32> -> vector<64x128xf32>
    %c0_14 = arith.constant 0 : index
    %c0_15 = arith.constant 0 : index
    %11 = vector.load %arg5[%c0_14, %c0_15] : memref<1x128xf32, #tpu.memory_space<vmem>>, vector<1x128xf32>
    %12 = vector.broadcast %11 : vector<1x128xf32> to vector<64x128xf32>
    %13 = arith.addf %10, %12 : vector<64x128xf32>
    %14 = arith.negf %13 : vector<64x128xf32>
    %15 = math.exp %14 : vector<64x128xf32>
    %cst_16 = arith.constant 1.000000e+00 : f32
    %16 = vector.broadcast %cst_16 : f32 to vector<64x128xf32>
    %17 = arith.addf %16, %15 : vector<64x128xf32>
    %18 = arith.divf %16, %17 : vector<64x128xf32>
    %19 = arith.mulf %13, %18 : vector<64x128xf32>
    %c0_17 = arith.constant 0 : index
    %c0_18 = arith.constant 0 : index
    %20 = vector.load %arg7[%c0_17, %c0_18] : memref<64x128xf32, #tpu.memory_space<vmem>>, vector<64x128xf32>
    tpu.vector_store %arg7[%c0_17, %c0_18], %19 {strides = array<i32>} : memref<64x128xf32, #tpu.memory_space<vmem>>, vector<64x128xf32>,
    return
  }
  func.func @transform_0(%arg0: i32) -> (i32, i32) {
    %c0_i32 = arith.constant 0 : i32
    %c0_i32_0 = arith.constant 0 : i32
    return %arg0, %c0_i32 : i32, i32
  }
  func.func @transform_1(%arg0: i32) -> (i32, i32) {
    %c0_i32 = arith.constant 0 : i32
    %c0_i32_0 = arith.constant 0 : i32
    %c0_i32_1 = arith.constant 0 : i32
    return %c0_i32, %c0_i32_0 : i32, i32
  }
  func.func @transform_2(%arg0: i32) -> (i32, i32) {
    %c0_i32 = arith.constant 0 : i32
    %c0_i32_0 = arith.constant 0 : i32
    %c0_i32_1 = arith.constant 0 : i32
    return %c0_i32, %c0_i32_0 : i32, i32
  }
  func.func @transform_3(%arg0: i32) -> (i32, i32) {
    %c0_i32 = arith.constant 0 : i32
    %c0_i32_0 = arith.constant 0 : i32
    %c0_i32_1 = arith.constant 0 : i32
    return %c0_i32, %c0_i32_0 : i32, i32
  }
  func.func @transform_4(%arg0: i32) -> (i32, i32) {
    %c0_i32 = arith.constant 0 : i32
    %c0_i32_0 = arith.constant 0 : i32
    %c0_i32_1 = arith.constant 0 : i32
    return %c0_i32, %c0_i32_0 : i32, i32
  }
  func.func @transform_5(%arg0: i32) -> (i32, i32) {
    %c0_i32 = arith.constant 0 : i32
    %c0_i32_0 = arith.constant 0 : i32
    return %arg0, %c0_i32 : i32, i32
  }
  func.func @transform_6(%arg0: i32) -> (i32, i32) {
    %c0_i32 = arith.constant 0 : i32
    %c0_i32_0 = arith.constant 0 : i32
    return %arg0, %c0_i32 : i32, i32
  }
}

</mosaic_0001>

<llo_original>
// kernel: custom_compose.1
$region0: #{custom_compose.1}
  #allocation0 [shape = 'u32[]', space=smem, size = 0x4, offset = 0x4, fixed_abs, tag = 'smem constant byte address 0x4 - core index']
  #allocation1 [shape = 'u32[144,128]{1,0:T(1,128)}', space=vmem, size = 0x12000, scoped, tag = 'internal scratch']
  #allocation2 [shape = 'f32[64,256]{1,0:T(8,128)}', space=vmem, size = 0x10000, scoped, tag = 'scratch operand']
  %s0 = inlined_call_operand.hbm [shape: f32[128,128], index: 0, kind: input, shape index: {}]
  %s1 = inlined_call_operand.hbm [shape: f32[128,256], index: 1, kind: input, shape index: {}]
  %s2 = inlined_call_operand.vmem [shape: f32[1,256], index: 2, kind: input, shape index: {}]
  %s3 = inlined_call_operand.hbm [shape: f32[256,128], index: 3, kind: input, shape index: {}]
  %s4 = inlined_call_operand.vmem [shape: f32[1,128], index: 4, kind: input, shape index: {}]
  %s5 = inlined_call_operand.hbm [shape: f32[128,256], index: 5, kind: output, shape index: {0}]
  %s6 = inlined_call_operand.hbm [shape: f32[128,128], index: 6, kind: output, shape index: {1}]
  %7 = xla_tuple %s5, %s6
  %s8 = sld [smem:[#allocation0]]
  $region73: #{custom_compose.1} parent=0
    _
  %s10 = ssub.s32 1, %s8
  %s11 = scalar_select 0, %s10, %s8
  $region1: #{custom_compose.1} parent=0
    #allocation3 [shape = 'u8[65536]{0}', space=vmem, size = 0x10000, scoped, tag = 'input window, operand 0']
    #allocation4 [shape = 's32[2]{0}', space=sflag, size = 0x8, scoped, tag = 'scoped memory for custom_compose.1']
    #allocation5 [shape = 's32[2]{0}', space=sflag, size = 0x8, scoped, tag = 'scoped memory for custom_compose.1']
    #allocation6 [shape = 'u8[131072]{0}', space=vmem, size = 0x20000, scoped, tag = 'input window, operand 1, single buffered']
    #allocation7 [shape = 's32[1]{0}', space=sflag, size = 0x4, scoped, tag = 'scoped memory for custom_compose.1']
    #allocation8 [shape = 'u8[131072]{0}', space=vmem, size = 0x20000, scoped, tag = 'input window, operand 3, single buffered']
    #allocation9 [shape = 'u8[131072]{0}', space=vmem, size = 0x20000, scoped, tag = 'output window, operand 0']
    #allocation10 [shape = 'u8[65536]{0}', space=vmem, size = 0x10000, scoped, tag = 'output window, operand 1']
    #allocation11 [shape = 's32[2]{0}', space=sflag, size = 0x8, scoped, tag = 'scoped memory for custom_compose.1']
    %12 = vsyncpa [#allocation4], 0
    %s13 = scalar_lea.sflag [#allocation4], 1
    %14 = vsyncpa %s13, 0
    %15 = vsyncpa [#allocation7], 0
    %16 = vsyncpa [#allocation5], 0
    %s17 = scalar_lea.sflag [#allocation5], 1
    %18 = vsyncpa %s17, 0
    %19 = vsyncpa [#allocation11], 0
    %s20 = scalar_lea.sflag [#allocation11], 1
    %21 = vsyncpa %s20, 0
    loop: start=0, step=1, limit=4
    $region2: #{custom_compose.1} parent=1 // loop_pre_header
      _
    $region3: #{custom_compose.1} parent=1 // loop_header
      %s23 = sphi 0, %s27
      %p24 = scmp.ge.s32.totalorder %s23, 4
      %s33 = sphi 0, %s35
      %s36 = sphi 0, %s33
      %s37 = sphi 0, %s36
      %s53 = sphi 0, %s37
      %s57 = sphi 0, %s57
      %s59 = sphi 0, %s57
      %s60 = sphi 0, %s59
      %s74 = sphi 0, %s60
      %s78 = sphi 0, %s78
      %s80 = sphi 0, %s78
      %s81 = sphi 0, %s80
      %s95 = sphi 0, %s81
      %s99 = sphi 0, %s99
      %s101 = sphi 0, %s99
      %s102 = sphi 0, %s101
      %s116 = sphi 0, %s102
      %s120 = sphi 0, %s120
      %s122 = sphi 0, %s120
      %s123 = sphi 0, %s122
      %s137 = sphi 0, %s123
      %s143 = sphi 0, %s145
      %s146 = sphi 0, %s143
      %s147 = sphi 0, %s146
      %s163 = sphi 0, %s147
      %s169 = sphi 0, %s171
      %s172 = sphi 0, %s169
      %s173 = sphi 0, %s172
      %s189 = sphi 0, %s173
    $region4: #{custom_compose.1} parent=1 // loop_header_branch
      %26 = sbr.rel (%p24) target = $region8
    $region5: #{custom_compose.1} parent=1 // loop_body
      %s28 = ssub.s32 %s23, 1
      %s29 = ssub.s32 %s23, 2
      %s30 = sadd.s32 %s23, 1
      %s31 = ssub.s32 %s23, %s30
      %p32 = scmp.eq.s32.totalorder %s31, 0
      %s34 = sadd.s32 %s33, 1
      %s35 = scalar_select %p32, %s33, %s34
      %p38 = pneg %p32
      %p39 = scmp.eq.s32.totalorder %s23, 1
      %p40 = por %p38, %p39
      %p41 = scmp.ne.s32.totalorder %s33, %s36
      %p42 = scmp.eq.s32.totalorder %s23, 0
      %p43 = por %p41, %p42
      %p44 = scmp.ne.s32.totalorder %s33, %s36
      %p45 = scmp.eq.s32.totalorder %s28, 1
      %p46 = por %p44, %p45
      %p47 = scmp.ne.s32.totalorder %s36, %s37
      %p48 = scmp.eq.s32.totalorder %s28, 0
      %p49 = por %p47, %p48
      %p50 = scmp.ne.s32.totalorder %s36, %s37
      %p51 = scmp.eq.s32.totalorder %s29, 1
      %p52 = por %p50, %p51
      %p54 = scmp.ne.s32.totalorder %s37, %s53
      %p55 = scmp.eq.s32.totalorder %s29, 0
      %p56 = por %p54, %p55
      %s58 = sadd.s32 %s57, 1
      %p61 = scmp.eq.s32.totalorder %s23, 1
      %p62 = scmp.ne.s32.totalorder %s57, %s59
      %p63 = scmp.eq.s32.totalorder %s23, 0
      %p64 = por %p62, %p63
      %p65 = scmp.ne.s32.totalorder %s57, %s59
      %p66 = scmp.eq.s32.totalorder %s28, 1
      %p67 = por %p65, %p66
      %p68 = scmp.ne.s32.totalorder %s59, %s60
      %p69 = scmp.eq.s32.totalorder %s28, 0
      %p70 = por %p68, %p69
      %p71 = scmp.ne.s32.totalorder %s59, %s60
      %p72 = scmp.eq.s32.totalorder %s29, 1
      %p73 = por %p71, %p72
      %p75 = scmp.ne.s32.totalorder %s60, %s74
      %p76 = scmp.eq.s32.totalorder %s29, 0
      %p77 = por %p75, %p76
      %s79 = sadd.s32 %s78, 1
      %p82 = scmp.eq.s32.totalorder %s23, 1
      %p83 = scmp.ne.s32.totalorder %s78, %s80
      %p84 = scmp.eq.s32.totalorder %s23, 0
      %p85 = por %p83, %p84
      %p86 = scmp.ne.s32.totalorder %s78, %s80
      %p87 = scmp.eq.s32.totalorder %s28, 1
      %p88 = por %p86, %p87
      %p89 = scmp.ne.s32.totalorder %s80, %s81
      %p90 = scmp.eq.s32.totalorder %s28, 0
      %p91 = por %p89, %p90
      %p92 = scmp.ne.s32.totalorder %s80, %s81
      %p93 = scmp.eq.s32.totalorder %s29, 1
      %p94 = por %p92, %p93
      %p96 = scmp.ne.s32.totalorder %s81, %s95
      %p97 = scmp.eq.s32.totalorder %s29, 0
      %p98 = por %p96, %p97
      %s100 = sadd.s32 %s99, 1
      %p103 = scmp.eq.s32.totalorder %s23, 1
      %p104 = scmp.ne.s32.totalorder %s99, %s101
      %p105 = scmp.eq.s32.totalorder %s23, 0
      %p106 = por %p104, %p105
      %p107 = scmp.ne.s32.totalorder %s99, %s101
      %p108 = scmp.eq.s32.totalorder %s28, 1
      %p109 = por %p107, %p108
      %p110 = scmp.ne.s32.totalorder %s101, %s102
      %p111 = scmp.eq.s32.totalorder %s28, 0
      %p112 = por %p110, %p111
      %p113 = scmp.ne.s32.totalorder %s101, %s102
      %p114 = scmp.eq.s32.totalorder %s29, 1
      %p115 = por %p113, %p114
      %p117 = scmp.ne.s32.totalorder %s102, %s116
      %p118 = scmp.eq.s32.totalorder %s29, 0
      %p119 = por %p117, %p118
      %s121 = sadd.s32 %s120, 1
      %p124 = scmp.eq.s32.totalorder %s23, 1
      %p125 = scmp.ne.s32.totalorder %s120, %s122
      %p126 = scmp.eq.s32.totalorder %s23, 0
      %p127 = por %p125, %p126
      %p128 = scmp.ne.s32.totalorder %s120, %s122
      %p129 = scmp.eq.s32.totalorder %s28, 1
      %p130 = por %p128, %p129
      %p131 = scmp.ne.s32.totalorder %s122, %s123
      %p132 = scmp.eq.s32.totalorder %s28, 0
      %p133 = por %p131, %p132
      %p134 = scmp.ne.s32.totalorder %s122, %s123
      %p135 = scmp.eq.s32.totalorder %s29, 1
      %p136 = por %p134, %p135
      %p138 = scmp.ne.s32.totalorder %s123, %s137
      %p139 = scmp.eq.s32.totalorder %s29, 0
      %p140 = por %p138, %p139
      %s141 = ssub.s32 %s23, %s30
      %p142 = scmp.eq.s32.totalorder %s141, 0
      %s144 = sadd.s32 %s143, 1
      %s145 = scalar_select %p142, %s143, %s144
      %p148 = pneg %p142
      %p149 = scmp.eq.s32.totalorder %s23, 1
      %p150 = por %p148, %p149
      %p151 = scmp.ne.s32.totalorder %s143, %s146
      %p152 = scmp.eq.s32.totalorder %s23, 0
      %p153 = por %p151, %p152
      %p154 = scmp.ne.s32.totalorder %s143, %s146
      %p155 = scmp.eq.s32.totalorder %s28, 1
      %p156 = por %p154, %p155
      %p157 = scmp.ne.s32.totalorder %s146, %s147
      %p158 = scmp.eq.s32.totalorder %s28, 0
      %p159 = por %p157, %p158
      %p160 = scmp.ne.s32.totalorder %s146, %s147
      %p161 = scmp.eq.s32.totalorder %s29, 1
      %p162 = por %p160, %p161
      %p164 = scmp.ne.s32.totalorder %s147, %s163
      %p165 = scmp.eq.s32.totalorder %s29, 0
      %p166 = por %p164, %p165
      %s167 = ssub.s32 %s23, %s30
      %p168 = scmp.eq.s32.totalorder %s167, 0
      %s170 = sadd.s32 %s169, 1
      %s171 = scalar_select %p168, %s169, %s170
      %p174 = pneg %p168
      %p175 = scmp.eq.s32.totalorder %s23, 1
      %p176 = por %p174, %p175
      %p177 = scmp.ne.s32.totalorder %s169, %s172
      %p178 = scmp.eq.s32.totalorder %s23, 0
      %p179 = por %p177, %p178
      %p180 = scmp.ne.s32.totalorder %s169, %s172
      %p181 = scmp.eq.s32.totalorder %s28, 1
      %p182 = por %p180, %p181
      %p183 = scmp.ne.s32.totalorder %s172, %s173
      %p184 = scmp.eq.s32.totalorder %s28, 0
      %p185 = por %p183, %p184
      %p186 = scmp.ne.s32.totalorder %s172, %s173
      %p187 = scmp.eq.s32.totalorder %s29, 1
      %p188 = por %p186, %p187
      %p190 = scmp.ne.s32.totalorder %s173, %s189
      %p191 = scmp.eq.s32.totalorder %s29, 0
      %p192 = por %p190, %p191
      %p193 = scmp.le.s32.totalorder 1, %s23
      %p194 = scmp.lt.s32.totalorder %s23, 3
      %p195 = pnand %p193, %p194
      %p196 = pneg %p195
      // Predicated region
      $region9: #{custom_compose.1} parent=5 // pred_check
        _
      $region10: #{custom_compose.1} parent=5 // pred_check_branch
        %198 = sbr.rel (%p195) target = $region12
      $region11: #{custom_compose.1} parent=5 // pred_region
        %s199 = ssub.s32 %s23, 1
        // Predicated region
        $region13: #{custom_compose.1} parent=11 // pred_check
          %p200 = pneg %p70
        $region14: #{custom_compose.1} parent=11 // pred_check_branch
          %202 = sbr.rel (%p200) target = $region16
        $region15: #{custom_compose.1} parent=11 // pred_region
          %s204 = ssub.s32 4096, 4096
          %205 = vsyncadd [#allocation7], %s204
          %s206 = sshll.u32 [#allocation6], 4
          %s207 = int_to_ptr.vmem [resolvable:$true] %s206
          %212 = dma.hbm_to_vmem [thread:$0]  %s1, 4096, %s207, [#allocation7], 256, 256, 16
        $region16: #{custom_compose.1} parent=11 // pred_fallthru
          _
        // Predicated region
        $region17: #{custom_compose.1} parent=11 // pred_check
          %p213 = pneg %p91
        $region18: #{custom_compose.1} parent=11 // pred_check_branch
          %215 = sbr.rel (%p213) target = $region20
        $region19: #{custom_compose.1} parent=11 // pred_region
          _
        $region20: #{custom_compose.1} parent=11 // pred_fallthru
          _
        // Predicated region
        $region21: #{custom_compose.1} parent=11 // pred_check
          %p216 = pneg %p112
        $region22: #{custom_compose.1} parent=11 // pred_check_branch
          %218 = sbr.rel (%p216) target = $region24
        $region23: #{custom_compose.1} parent=11 // pred_region
          %s220 = ssub.s32 4096, 4096
          %221 = vsyncadd [#allocation7], %s220
          %s222 = sshll.u32 [#allocation8], 4
          %s223 = int_to_ptr.vmem [resolvable:$true] %s222
          %228 = dma.hbm_to_vmem [thread:$0]  %s3, 4096, %s223, [#allocation7], 128, 128, 8
        $region24: #{custom_compose.1} parent=11 // pred_fallthru
          _
        // Predicated region
        $region25: #{custom_compose.1} parent=11 // pred_check
          %p229 = pneg %p133
        $region26: #{custom_compose.1} parent=11 // pred_check_branch
          %231 = sbr.rel (%p229) target = $region28
        $region27: #{custom_compose.1} parent=11 // pred_region
          _
        $region28: #{custom_compose.1} parent=11 // pred_fallthru
          _
      $region12: #{custom_compose.1} parent=5 // pred_fallthru
        _
      %p232 = scmp.lt.s32.totalorder %s23, 2
      // Predicated region
      $region29: #{custom_compose.1} parent=5 // pred_check
        %p233 = pneg %p232
      $region30: #{custom_compose.1} parent=5 // pred_check_branch
        %235 = sbr.rel (%p233) target = $region32
      $region31: #{custom_compose.1} parent=5 // pred_region
        // Predicated region
        $region33: #{custom_compose.1} parent=31 // pred_check
          %p236 = pneg %p43
        $region34: #{custom_compose.1} parent=31 // pred_check_branch
          %238 = sbr.rel (%p236) target = $region36
        $region35: #{custom_compose.1} parent=31 // pred_region
          %s239 = sand.u32 %s33, 1
          %s240 = scalar_lea.sflag [#allocation4], %s239
          %s241 = sand.u32 %s33, 1
          %s242 = smul.addr %s241, 64
          %s243 = scalar_lea.vmem [#allocation3], %s242
          %s244 = smul.u32 8, %s23
          %s246 = ssub.s32 1024, 1024
          %247 = vsyncadd %s240, %s246
          %s248 = smul.addr %s244, 128
          %s249 = scalar_lea.hbm %s0, %s248
          %s250 = sshll.u32 %s243, 4
          %s251 = int_to_ptr.vmem [resolvable:$true] %s250
          %256 = dma.hbm_to_vmem [thread:$0]  %s249, 1024, %s251, %s240, 128, 128, 8
        $region36: #{custom_compose.1} parent=31 // pred_fallthru
          _
      $region32: #{custom_compose.1} parent=5 // pred_fallthru
        _
      %p257 = scmp.le.s32.totalorder 1, %s23
      %p258 = scmp.lt.s32.totalorder %s23, 3
      %p259 = pnand %p257, %p258
      %p260 = pneg %p259
      // Predicated region
      $region37: #{custom_compose.1} parent=5 // pred_check
        _
      $region38: #{custom_compose.1} parent=5 // pred_check_branch
        %262 = sbr.rel (%p259) target = $region40
      $region39: #{custom_compose.1} parent=5 // pred_region
        %s263 = ssub.s32 %s23, 1
        %s264 = sand.u32 %s36, 1
        %s265 = scalar_lea.sflag [#allocation4], %s264
        %s266 = sand.u32 %s36, 1
        %s267 = smul.addr %s266, 64
        %s268 = scalar_lea.vmem [#allocation3], %s267
        // Predicated region
        $region41: #{custom_compose.1} parent=39 // pred_check
          %p269 = pneg %p49
        $region42: #{custom_compose.1} parent=39 // pred_check_branch
          %271 = sbr.rel (%p269) target = $region44
        $region43: #{custom_compose.1} parent=39 // pred_region
          %272 = dma.done %s265, 1024
        $region44: #{custom_compose.1} parent=39 // pred_fallthru
          _
        // Predicated region
        $region45: #{custom_compose.1} parent=39 // pred_check
          %p273 = pneg %p70
        $region46: #{custom_compose.1} parent=39 // pred_check_branch
          %275 = sbr.rel (%p273) target = $region48
        $region47: #{custom_compose.1} parent=39 // pred_region
          %276 = dma.done [#allocation7], 4096
        $region48: #{custom_compose.1} parent=39 // pred_fallthru
          _
        // Predicated region
        $region49: #{custom_compose.1} parent=39 // pred_check
          %p277 = pneg %p112
        $region50: #{custom_compose.1} parent=39 // pred_check_branch
          %279 = sbr.rel (%p277) target = $region52
        $region51: #{custom_compose.1} parent=39 // pred_region
          %280 = dma.done [#allocation7], 4096
        $region52: #{custom_compose.1} parent=39 // pred_fallthru
          _
        %s281 = sand.u32 %s36, 1
        %s282 = scalar_lea.sflag [#allocation4], %s281
        %s283 = sand.u32 %s36, 1
        %s284 = smul.addr %s283, 64
        %s285 = scalar_lea.vmem [#allocation3], %s284
        %p286 = pneg %p49
        %p287 = pneg %p46
        %p288 = pneg %p70
        %p289 = pneg %p67
        %p290 = pneg %p91
        %p291 = pneg %p88
        %p292 = pneg %p112
        %p293 = pneg %p109
        %p294 = pneg %p133
        %p295 = pneg %p130
        %p296 = pneg %p159
        %p297 = pneg %p156
        %s298 = sand.u32 %s146, 1
        %s299 = scalar_lea.sflag [#allocation5], %s298
        %s300 = sand.u32 %s146, 1
        %s301 = smul.addr %s300, 128
        %s302 = scalar_lea.vmem [#allocation9], %s301
        %p303 = pneg %p185
        %p304 = pneg %p182
        %s305 = sand.u32 %s172, 1
        %s306 = scalar_lea.sflag [#allocation11], %s305
        %s307 = sand.u32 %s172, 1
        %s308 = smul.addr %s307, 64
        %s309 = scalar_lea.vmem [#allocation10], %s308
        %s310 = smul.u32 8, %s28
        %s311 = smul.u32 8, %s28
        %s312 = smul.u32 8, %s28
        %v313 = vld [vmem:[%s268] sm:$0xff]
        %v314 = vld [vmem:[%s268 + $0x8] sm:$0xff]
        %v315 = vld [vmem:[%s268 + $0x10] sm:$0xff]
        %v316 = vld [vmem:[%s268 + $0x18] sm:$0xff]
        %v317 = vld [vmem:[%s268 + $0x20] sm:$0xff]
        %v318 = vld [vmem:[%s268 + $0x28] sm:$0xff]
        %v319 = vld [vmem:[%s268 + $0x30] sm:$0xff]
        %v320 = vld [vmem:[%s268 + $0x38] sm:$0xff]
        %v321 = vld [vmem:[#allocation6] sm:$0xff]
        %v322 = vld [vmem:[#allocation6 + $0x8] sm:$0xff]
        %v323 = vld [vmem:[#allocation6 + $0x10] sm:$0xff]
        %v324 = vld [vmem:[#allocation6 + $0x18] sm:$0xff]
        %v325 = vld [vmem:[#allocation6 + $0x20] sm:$0xff]
        %v326 = vld [vmem:[#allocation6 + $0x28] sm:$0xff]
        %v327 = vld [vmem:[#allocation6 + $0x30] sm:$0xff]
        %v328 = vld [vmem:[#allocation6 + $0x38] sm:$0xff]
        %v329 = vld [vmem:[#allocation6 + $0x40] sm:$0xff]
        %v330 = vld [vmem:[#allocation6 + $0x48] sm:$0xff]
        %v331 = vld [vmem:[#allocation6 + $0x50] sm:$0xff]
        %v332 = vld [vmem:[#allocation6 + $0x58] sm:$0xff]
        %v333 = vld [vmem:[#allocation6 + $0x60] sm:$0xff]
        %v334 = vld [vmem:[#allocation6 + $0x68] sm:$0xff]
        %v335 = vld [vmem:[#allocation6 + $0x70] sm:$0xff]
        %v336 = vld [vmem:[#allocation6 + $0x78] sm:$0xff]
        %v337 = vld [vmem:[#allocation6 + $0x80] sm:$0xff]
        %v338 = vld [vmem:[#allocation6 + $0x88] sm:$0xff]
        %v339 = vld [vmem:[#allocation6 + $0x90] sm:$0xff]
        %v340 = vld [vmem:[#allocation6 + $0x98] sm:$0xff]
        %v341 = vld [vmem:[#allocation6 + $0xa0] sm:$0xff]
        %v342 = vld [vmem:[#allocation6 + $0xa8] sm:$0xff]
        %v343 = vld [vmem:[#allocation6 + $0xb0] sm:$0xff]
        %v344 = vld [vmem:[#allocation6 + $0xb8] sm:$0xff]
        %v345 = vld [vmem:[#allocation6 + $0xc0] sm:$0xff]
        %v346 = vld [vmem:[#allocation6 + $0xc8] sm:$0xff]
        %v347 = vld [vmem:[#allocation6 + $0xd0] sm:$0xff]
        %v348 = vld [vmem:[#allocation6 + $0xd8] sm:$0xff]
        %v349 = vld [vmem:[#allocation6 + $0xe0] sm:$0xff]
        %v350 = vld [vmem:[#allocation6 + $0xe8] sm:$0xff]
        %v351 = vld [vmem:[#allocation6 + $0xf0] sm:$0xff]
        %v352 = vld [vmem:[#allocation6 + $0xf8] sm:$0xff]
        %v353 = vld [vmem:[%s2] sm:$0x3]
        %v355 = vlaneseq
        %v356 = vshrl.u32 %v355, 7
        %v357 = vsub.s32 0, %v356
        %v358 = vrot.slane %v353, %v357
        %v359 = vlaneseq
        %v360 = vshrl.u32 %v359, 7
        %v361 = vsub.s32 1, %v360
        %v362 = vrot.slane %v353, %v361
        %365 = vmatprep.subr.mxu0 %v322
        %366 = vmatpush1.msra.mxu0 %v321
        %367 = vmatprep.subr.mxu0 %v324
        %368 = vmatpush1.msra.mxu0 %v323
        %369 = vmatprep.subr.mxu0 %v326
        %370 = vmatpush1.msra.mxu0 %v325
        %371 = vmatprep.subr.mxu0 %v328
        %372 = vmatpush1.msra.mxu0 %v327
        %373 = vmatprep.subr.mxu0 %v330
        %374 = vmatpush1.msra.mxu0 %v329
        %375 = vmatprep.subr.mxu0 %v332
        %376 = vmatpush1.msra.mxu0 %v331
        %377 = vmatprep.subr.mxu0 %v334
        %378 = vmatpush1.msra.mxu0 %v333
        %379 = vmatprep.subr.mxu0 %v336
        %380 = vmatpush1.msra.mxu0 %v335
        %381 = vmatprep.subr.mxu0 %v338
        %382 = vmatpush1.msra.mxu0 %v337
        %383 = vmatprep.subr.mxu0 %v340
        %384 = vmatpush1.msra.mxu0 %v339
        %385 = vmatprep.subr.mxu0 %v342
        %386 = vmatpush1.msra.mxu0 %v341
        %387 = vmatprep.subr.mxu0 %v344
        %388 = vmatpush1.msra.mxu0 %v343
        %389 = vmatprep.subr.mxu0 %v346
        %390 = vmatpush1.msra.mxu0 %v345
        %391 = vmatprep.subr.mxu0 %v348
        %392 = vmatpush1.msra.mxu0 %v347
        %393 = vmatprep.subr.mxu0 %v350
        %394 = vmatpush1.msra.mxu0 %v349
        %395 = vmatprep.subr.mxu0 %v352
        %396 = vmatpush1.msra.mxu0 %v351
        %397 = vmatprep.subr.mxu0 0.0
        %398 = vmatpush1.msra.mxu0 0.0
        %399 = vmatprep.subr.mxu0 0.0
        %400 = vmatpush1.msra.mxu0 0.0
        %401 = vmatprep.subr.mxu0 0.0
        %402 = vmatpush1.msra.mxu0 0.0
        %403 = vmatprep.subr.mxu0 0.0
        %404 = vmatpush1.msra.mxu0 0.0
        %405 = vmatprep.subr.mxu0 0.0
        %406 = vmatpush1.msra.mxu0 0.0
        %407 = vmatprep.subr.mxu0 0.0
        %408 = vmatpush1.msra.mxu0 0.0
        %409 = vmatprep.subr.mxu0 0.0
        %410 = vmatpush1.msra.mxu0 0.0
        %411 = vmatprep.subr.mxu0 0.0
        %412 = vmatpush1.msra.mxu0 0.0
        %413 = vmatprep.subr.mxu0 0.0
        %414 = vmatpush1.msra.mxu0 0.0
        %415 = vmatprep.subr.mxu0 0.0
        %416 = vmatpush1.msra.mxu0 0.0
        %417 = vmatprep.subr.mxu0 0.0
        %418 = vmatpush1.msra.mxu0 0.0
        %419 = vmatprep.subr.mxu0 0.0
        %420 = vmatpush1.msra.mxu0 0.0
        %421 = vmatprep.subr.mxu0 0.0
        %422 = vmatpush1.msra.mxu0 0.0
        %423 = vmatprep.subr.mxu0 0.0
        %424 = vmatpush1.msra.mxu0 0.0
        %425 = vmatprep.subr.mxu0 0.0
        %426 = vmatpush1.msra.mxu0 0.0
        %427 = vmatprep.subr.mxu0 0.0
        %428 = vmatpush1.msra.mxu0 0.0
        %429 = vmatprep.mubr.f32.mxu0 0.0
        %430 = vmatmul.mubr.f32.gmra.mrb[0].mxu0 %v313
        %v431 = vpop.f32.mrb[0].mxu0
        %v432 = vadd.f32 %v358, %v431
        %v433 = vpop.f32.mrb[0].mxu0
        %v434 = vadd.f32 %v362, %v433
        %435 = vmatprep.mubr.f32.mxu0 0.0
        %436 = vmatmul.mubr.f32.gmra.mrb[0].mxu0 %v314
        %v437 = vpop.f32.mrb[0].mxu0
        %v438 = vadd.f32 %v358, %v437
        %v439 = vpop.f32.mrb[0].mxu0
        %v440 = vadd.f32 %v362, %v439
        %441 = vmatprep.mubr.f32.mxu0 0.0
        %442 = vmatmul.mubr.f32.gmra.mrb[0].mxu0 %v315
        %v443 = vpop.f32.mrb[0].mxu0
        %v444 = vadd.f32 %v358, %v443
        %v445 = vpop.f32.mrb[0].mxu0
        %v446 = vadd.f32 %v362, %v445
        %447 = vmatprep.mubr.f32.mxu0 0.0
        %448 = vmatmul.mubr.f32.gmra.mrb[0].mxu0 %v316
        %v449 = vpop.f32.mrb[0].mxu0
        %v450 = vadd.f32 %v358, %v449
        %v451 = vpop.f32.mrb[0].mxu0
        %v452 = vadd.f32 %v362, %v451
        %453 = vmatprep.mubr.f32.mxu0 0.0
        %454 = vmatmul.mubr.f32.gmra.mrb[0].mxu0 %v317
        %v455 = vpop.f32.mrb[0].mxu0
        %v456 = vadd.f32 %v358, %v455
        %v457 = vpop.f32.mrb[0].mxu0
        %v458 = vadd.f32 %v362, %v457
        %459 = vmatprep.mubr.f32.mxu0 0.0
        %460 = vmatmul.mubr.f32.gmra.mrb[0].mxu0 %v318
        %v461 = vpop.f32.mrb[0].mxu0
        %v462 = vadd.f32 %v358, %v461
        %v463 = vpop.f32.mrb[0].mxu0
        %v464 = vadd.f32 %v362, %v463
        %465 = vmatprep.mubr.f32.mxu0 0.0
        %466 = vmatmul.mubr.f32.gmra.mrb[0].mxu0 %v319
        %v467 = vpop.f32.mrb[0].mxu0
        %v468 = vadd.f32 %v358, %v467
        %v469 = vpop.f32.mrb[0].mxu0
        %v470 = vadd.f32 %v362, %v469
        %471 = vmatprep.mubr.f32.mxu0 0.0
        %472 = vmatmul.mubr.f32.gmra.mrb[0].mxu0 %v320
        %v473 = vpop.f32.mrb[0].mxu0
        %v474 = vadd.f32 %v358, %v473
        %v475 = vpop.f32.mrb[0].mxu0
        %v476 = vadd.f32 %v362, %v475
        %477 = vdwg.mxu0
        %478 = vst [vmem:[#allocation2] sm:$0xff] %v432
        %479 = vst [vmem:[#allocation2 + $0x8] sm:$0xff] %v434
        %480 = vst [vmem:[#allocation2 + $0x10] sm:$0xff] %v438
        %481 = vst [vmem:[#allocation2 + $0x18] sm:$0xff] %v440
        %482 = vst [vmem:[#allocation2 + $0x20] sm:$0xff] %v444
        %483 = vst [vmem:[#allocation2 + $0x28] sm:$0xff] %v446
        %484 = vst [vmem:[#allocation2 + $0x30] sm:$0xff] %v450
        %485 = vst [vmem:[#allocation2 + $0x38] sm:$0xff] %v452
        %486 = vst [vmem:[#allocation2 + $0x40] sm:$0xff] %v456
        %487 = vst [vmem:[#allocation2 + $0x48] sm:$0xff] %v458
        %488 = vst [vmem:[#allocation2 + $0x50] sm:$0xff] %v462
        %489 = vst [vmem:[#allocation2 + $0x58] sm:$0xff] %v464
        %490 = vst [vmem:[#allocation2 + $0x60] sm:$0xff] %v468
        %491 = vst [vmem:[#allocation2 + $0x68] sm:$0xff] %v470
        %492 = vst [vmem:[#allocation2 + $0x70] sm:$0xff] %v474
        %493 = vst [vmem:[#allocation2 + $0x78] sm:$0xff] %v476
        %494 = vst [vmem:[%s302] sm:$0xff] %v432
        %495 = vst [vmem:[%s302 + $0x8] sm:$0xff] %v434
        %496 = vst [vmem:[%s302 + $0x10] sm:$0xff] %v438
        %497 = vst [vmem:[%s302 + $0x18] sm:$0xff] %v440
        %498 = vst [vmem:[%s302 + $0x20] sm:$0xff] %v444
        %499 = vst [vmem:[%s302 + $0x28] sm:$0xff] %v446
        %500 = vst [vmem:[%s302 + $0x30] sm:$0xff] %v450
        %501 = vst [vmem:[%s302 + $0x38] sm:$0xff] %v452
        %502 = vst [vmem:[%s302 + $0x40] sm:$0xff] %v456
        %503 = vst [vmem:[%s302 + $0x48] sm:$0xff] %v458
        %504 = vst [vmem:[%s302 + $0x50] sm:$0xff] %v462
        %505 = vst [vmem:[%s302 + $0x58] sm:$0xff] %v464
        %506 = vst [vmem:[%s302 + $0x60] sm:$0xff] %v468
        %507 = vst [vmem:[%s302 + $0x68] sm:$0xff] %v470
        %508 = vst [vmem:[%s302 + $0x70] sm:$0xff] %v474
        %509 = vst [vmem:[%s302 + $0x78] sm:$0xff] %v476
        %v510 = vld [vmem:[#allocation2] sm:$0xff]
        %v511 = vld [vmem:[#allocation2 + $0x8] sm:$0xff]
        %v512 = vld [vmem:[#allocation2 + $0x10] sm:$0xff]
        %v513 = vld [vmem:[#allocation2 + $0x18] sm:$0xff]
        %v514 = vld [vmem:[#allocation2 + $0x20] sm:$0xff]
        %v515 = vld [vmem:[#allocation2 + $0x28] sm:$0xff]
        %v516 = vld [vmem:[#allocation2 + $0x30] sm:$0xff]
        %v517 = vld [vmem:[#allocation2 + $0x38] sm:$0xff]
        %v518 = vld [vmem:[#allocation2 + $0x40] sm:$0xff]
        %v519 = vld [vmem:[#allocation2 + $0x48] sm:$0xff]
        %v520 = vld [vmem:[#allocation2 + $0x50] sm:$0xff]
        %v521 = vld [vmem:[#allocation2 + $0x58] sm:$0xff]
        %v522 = vld [vmem:[#allocation2 + $0x60] sm:$0xff]
        %v523 = vld [vmem:[#allocation2 + $0x68] sm:$0xff]
        %v524 = vld [vmem:[#allocation2 + $0x70] sm:$0xff]
        %v525 = vld [vmem:[#allocation2 + $0x78] sm:$0xff]
        %v526 = vld [vmem:[#allocation8] sm:$0xff]
        %v527 = vld [vmem:[#allocation8 + $0x8] sm:$0xff]
        %v528 = vld [vmem:[#allocation8 + $0x10] sm:$0xff]
        %v529 = vld [vmem:[#allocation8 + $0x18] sm:$0xff]
        %v530 = vld [vmem:[#allocation8 + $0x20] sm:$0xff]
        %v531 = vld [vmem:[#allocation8 + $0x28] sm:$0xff]
        %v532 = vld [vmem:[#allocation8 + $0x30] sm:$0xff]
        %v533 = vld [vmem:[#allocation8 + $0x38] sm:$0xff]
        %v534 = vld [vmem:[#allocation8 + $0x40] sm:$0xff]
        %v535 = vld [vmem:[#allocation8 + $0x48] sm:$0xff]
        %v536 = vld [vmem:[#allocation8 + $0x50] sm:$0xff]
        %v537 = vld [vmem:[#allocation8 + $0x58] sm:$0xff]
        %v538 = vld [vmem:[#allocation8 + $0x60] sm:$0xff]
        %v539 = vld [vmem:[#allocation8 + $0x68] sm:$0xff]
        %v540 = vld [vmem:[#allocation8 + $0x70] sm:$0xff]
        %v541 = vld [vmem:[#allocation8 + $0x78] sm:$0xff]
        %v542 = vld [vmem:[#allocation8 + $0x80] sm:$0xff]
        %v543 = vld [vmem:[#allocation8 + $0x88] sm:$0xff]
        %v544 = vld [vmem:[#allocation8 + $0x90] sm:$0xff]
        %v545 = vld [vmem:[#allocation8 + $0x98] sm:$0xff]
        %v546 = vld [vmem:[#allocation8 + $0xa0] sm:$0xff]
        %v547 = vld [vmem:[#allocation8 + $0xa8] sm:$0xff]
        %v548 = vld [vmem:[#allocation8 + $0xb0] sm:$0xff]
        %v549 = vld [vmem:[#allocation8 + $0xb8] sm:$0xff]
        %v550 = vld [vmem:[#allocation8 + $0xc0] sm:$0xff]
        %v551 = vld [vmem:[#allocation8 + $0xc8] sm:$0xff]
        %v552 = vld [vmem:[#allocation8 + $0xd0] sm:$0xff]
        %v553 = vld [vmem:[#allocation8 + $0xd8] sm:$0xff]
        %v554 = vld [vmem:[#allocation8 + $0xe0] sm:$0xff]
        %v555 = vld [vmem:[#allocation8 + $0xe8] sm:$0xff]
        %v556 = vld [vmem:[#allocation8 + $0xf0] sm:$0xff]
        %v557 = vld [vmem:[#allocation8 + $0xf8] sm:$0xff]
        %v558 = vld [vmem:[%s4] sm:$0x1]
        %v560 = vlaneseq
        %v561 = vshrl.u32 %v560, 7
        %v562 = vsub.s32 0, %v561
        %v563 = vrot.slane %v558, %v562
        %565 = vmatprep.subr.mxu0 0.0
        %566 = vmatpush1.msra.mxu0 %v526
        %567 = vmatprep.subr.mxu0 0.0
        %568 = vmatpush1.msra.mxu0 %v527
        %569 = vmatprep.subr.mxu0 0.0
        %570 = vmatpush1.msra.mxu0 %v528
        %571 = vmatprep.subr.mxu0 0.0
        %572 = vmatpush1.msra.mxu0 %v529
        %573 = vmatprep.subr.mxu0 0.0
        %574 = vmatpush1.msra.mxu0 %v530
        %575 = vmatprep.subr.mxu0 0.0
        %576 = vmatpush1.msra.mxu0 %v531
        %577 = vmatprep.subr.mxu0 0.0
        %578 = vmatpush1.msra.mxu0 %v532
        %579 = vmatprep.subr.mxu0 0.0
        %580 = vmatpush1.msra.mxu0 %v533
        %581 = vmatprep.subr.mxu0 0.0
        %582 = vmatpush1.msra.mxu0 %v534
        %583 = vmatprep.subr.mxu0 0.0
        %584 = vmatpush1.msra.mxu0 %v535
        %585 = vmatprep.subr.mxu0 0.0
        %586 = vmatpush1.msra.mxu0 %v536
        %587 = vmatprep.subr.mxu0 0.0
        %588 = vmatpush1.msra.mxu0 %v537
        %589 = vmatprep.subr.mxu0 0.0
        %590 = vmatpush1.msra.mxu0 %v538
        %591 = vmatprep.subr.mxu0 0.0
        %592 = vmatpush1.msra.mxu0 %v539
        %593 = vmatprep.subr.mxu0 0.0
        %594 = vmatpush1.msra.mxu0 %v540
        %595 = vmatprep.subr.mxu0 0.0
        %596 = vmatpush1.msra.mxu0 %v541
        %597 = vmatprep.subr.mxu0 0.0
        %598 = vmatpush1.msra.mxu0 %v542
        %599 = vmatprep.subr.mxu0 0.0
        %600 = vmatpush1.msra.mxu0 %v543
        %601 = vmatprep.subr.mxu0 0.0
        %602 = vmatpush1.msra.mxu0 %v544
        %603 = vmatprep.subr.mxu0 0.0
        %604 = vmatpush1.msra.mxu0 %v545
        %605 = vmatprep.subr.mxu0 0.0
        %606 = vmatpush1.msra.mxu0 %v546
        %607 = vmatprep.subr.mxu0 0.0
        %608 = vmatpush1.msra.mxu0 %v547
        %609 = vmatprep.subr.mxu0 0.0
        %610 = vmatpush1.msra.mxu0 %v548
        %611 = vmatprep.subr.mxu0 0.0
        %612 = vmatpush1.msra.mxu0 %v549
        %613 = vmatprep.subr.mxu0 0.0
        %614 = vmatpush1.msra.mxu0 %v550
        %615 = vmatprep.subr.mxu0 0.0
        %616 = vmatpush1.msra.mxu0 %v551
        %617 = vmatprep.subr.mxu0 0.0
        %618 = vmatpush1.msra.mxu0 %v552
        %619 = vmatprep.subr.mxu0 0.0
        %620 = vmatpush1.msra.mxu0 %v553
        %621 = vmatprep.subr.mxu0 0.0
        %622 = vmatpush1.msra.mxu0 %v554
        %623 = vmatprep.subr.mxu0 0.0
        %624 = vmatpush1.msra.mxu0 %v555
        %625 = vmatprep.subr.mxu0 0.0
        %626 = vmatpush1.msra.mxu0 %v556
        %627 = vmatprep.subr.mxu0 0.0
        %628 = vmatpush1.msra.mxu0 %v557
        %629 = vmatprep.mubr.f32.mxu0 %v511
        %630 = vmatmul.mubr.f32.gmra.mrb[0].mxu0 %v510
        %v631 = vpop.f32.mrb[0].mxu0
        %v632 = vadd.f32 %v563, %v631
        %v633 = vpop.f32.mrb[0].mxu0
        %634 = vmatprep.mubr.f32.mxu0 %v513
        %635 = vmatmul.mubr.f32.gmra.mrb[0].mxu0 %v512
        %v636 = vpop.f32.mrb[0].mxu0
        %v637 = vadd.f32 %v563, %v636
        %v638 = vpop.f32.mrb[0].mxu0
        %639 = vmatprep.mubr.f32.mxu0 %v515
        %640 = vmatmul.mubr.f32.gmra.mrb[0].mxu0 %v514
        %v641 = vpop.f32.mrb[0].mxu0
        %v642 = vadd.f32 %v563, %v641
        %v643 = vpop.f32.mrb[0].mxu0
        %644 = vmatprep.mubr.f32.mxu0 %v517
        %645 = vmatmul.mubr.f32.gmra.mrb[0].mxu0 %v516
        %v646 = vpop.f32.mrb[0].mxu0
        %v647 = vadd.f32 %v563, %v646
        %v648 = vpop.f32.mrb[0].mxu0
        %649 = vmatprep.mubr.f32.mxu0 %v519
        %650 = vmatmul.mubr.f32.gmra.mrb[0].mxu0 %v518
        %v651 = vpop.f32.mrb[0].mxu0
        %v652 = vadd.f32 %v563, %v651
        %v653 = vpop.f32.mrb[0].mxu0
        %654 = vmatprep.mubr.f32.mxu0 %v521
        %655 = vmatmul.mubr.f32.gmra.mrb[0].mxu0 %v520
        %v656 = vpop.f32.mrb[0].mxu0
        %v657 = vadd.f32 %v563, %v656
        %v658 = vpop.f32.mrb[0].mxu0
        %659 = vmatprep.mubr.f32.mxu0 %v523
        %660 = vmatmul.mubr.f32.gmra.mrb[0].mxu0 %v522
        %v661 = vpop.f32.mrb[0].mxu0
        %v662 = vadd.f32 %v563, %v661
        %v663 = vpop.f32.mrb[0].mxu0
        %664 = vmatprep.mubr.f32.mxu0 %v525
        %665 = vmatmul.mubr.f32.gmra.mrb[0].mxu0 %v524
        %v666 = vpop.f32.mrb[0].mxu0
        %v667 = vadd.f32 %v563, %v666
        %v668 = vpop.f32.mrb[0].mxu0
        %669 = vdwg.mxu0
        %v670 = vxor.u32 %v632, 2147483648
        %v671 = vxor.u32 %v637, 2147483648
        %v672 = vxor.u32 %v642, 2147483648
        %v673 = vxor.u32 %v647, 2147483648
        %v674 = vxor.u32 %v652, 2147483648
        %v675 = vxor.u32 %v657, 2147483648
        %v676 = vxor.u32 %v662, 2147483648
        %v677 = vxor.u32 %v667, 2147483648
        %v678 = vmul.f32 %v670, 1.442695
        %v679 = vpow.pop %v678
        %v680 = vmul.f32 %v671, 1.442695
        %v681 = vpow.pop %v680
        %v682 = vmul.f32 %v672, 1.442695
        %v683 = vpow.pop %v682
        %v684 = vmul.f32 %v673, 1.442695
        %v685 = vpow.pop %v684
        %v686 = vmul.f32 %v674, 1.442695
        %v687 = vpow.pop %v686
        %v688 = vmul.f32 %v675, 1.442695
        %v689 = vpow.pop %v688
        %v690 = vmul.f32 %v676, 1.442695
        %v691 = vpow.pop %v690
        %v692 = vmul.f32 %v677, 1.442695
        %v693 = vpow.pop %v692
        %v694 = vadd.f32 %v679, 1.0
        %v695 = vadd.f32 %v681, 1.0
        %v696 = vadd.f32 %v683, 1.0
        %v697 = vadd.f32 %v685, 1.0
        %v698 = vadd.f32 %v687, 1.0
        %v699 = vadd.f32 %v689, 1.0
        %v700 = vadd.f32 %v691, 1.0
        %v701 = vadd.f32 %v693, 1.0
        %v702 = vrcp.pop %v694
        %v703 = vmul.f32 1.0, %v702
        %v704 = vrcp.pop %v695
        %v705 = vmul.f32 1.0, %v704
        %v706 = vrcp.pop %v696
        %v707 = vmul.f32 1.0, %v706
        %v708 = vrcp.pop %v697
        %v709 = vmul.f32 1.0, %v708
        %v710 = vrcp.pop %v698
        %v711 = vmul.f32 1.0, %v710
        %v712 = vrcp.pop %v699
        %v713 = vmul.f32 1.0, %v712
        %v714 = vrcp.pop %v700
        %v715 = vmul.f32 1.0, %v714
        %v716 = vrcp.pop %v701
        %v717 = vmul.f32 1.0, %v716
        %v718 = vmul.f32 %v632, %v703
        %v719 = vmul.f32 %v637, %v705
        %v720 = vmul.f32 %v642, %v707
        %v721 = vmul.f32 %v647, %v709
        %v722 = vmul.f32 %v652, %v711
        %v723 = vmul.f32 %v657, %v713
        %v724 = vmul.f32 %v662, %v715
        %v725 = vmul.f32 %v667, %v717
        %726 = vst [vmem:[%s309] sm:$0xff] %v718
        %727 = vst [vmem:[%s309 + $0x8] sm:$0xff] %v719
        %728 = vst [vmem:[%s309 + $0x10] sm:$0xff] %v720
        %729 = vst [vmem:[%s309 + $0x18] sm:$0xff] %v721
        %730 = vst [vmem:[%s309 + $0x20] sm:$0xff] %v722
        %731 = vst [vmem:[%s309 + $0x28] sm:$0xff] %v723
        %732 = vst [vmem:[%s309 + $0x30] sm:$0xff] %v724
        %733 = vst [vmem:[%s309 + $0x38] sm:$0xff] %v725
        %s734 = sand.u32 %s146, 1
        %s735 = scalar_lea.sflag [#allocation5], %s734
        %s736 = sand.u32 %s146, 1
        %s737 = smul.addr %s736, 128
        %s738 = scalar_lea.vmem [#allocation9], %s737
        %s739 = sand.u32 %s172, 1
        %s740 = scalar_lea.sflag [#allocation11], %s739
        %s741 = sand.u32 %s172, 1
        %s742 = smul.addr %s741, 64
        %s743 = scalar_lea.vmem [#allocation10], %s742
        // Predicated region
        $region53: #{custom_compose.1} parent=39 // pred_check
          %p744 = pneg %p156
        $region54: #{custom_compose.1} parent=39 // pred_check_branch
          %746 = sbr.rel (%p744) target = $region56
        $region55: #{custom_compose.1} parent=39 // pred_region
          %s747 = smul.u32 8, %s28
          %s749 = ssub.s32 2048, 2048
          %750 = vsyncadd %s735, %s749
          %s751 = smul.addr %s747, 2
          %s752 = smul.addr %s751, 128
          %s753 = scalar_lea.hbm %s5, %s752
          %s754 = sshll.u32 %s738, 4
          %s755 = int_to_ptr.vmem [resolvable:$true] %s754
          %760 = dma.vmem_to_hbm [thread:$0]  %s755, 2048, %s753, %s735, 256, 256, 16
        $region56: #{custom_compose.1} parent=39 // pred_fallthru
          _
        // Predicated region
        $region57: #{custom_compose.1} parent=39 // pred_check
          %p761 = pneg %p182
        $region58: #{custom_compose.1} parent=39 // pred_check_branch
          %763 = sbr.rel (%p761) target = $region60
        $region59: #{custom_compose.1} parent=39 // pred_region
          %s764 = smul.u32 8, %s28
          %s766 = ssub.s32 1024, 1024
          %767 = vsyncadd %s740, %s766
          %s768 = smul.addr %s764, 128
          %s769 = scalar_lea.hbm %s6, %s768
          %s770 = sshll.u32 %s743, 4
          %s771 = int_to_ptr.vmem [resolvable:$true] %s770
          %776 = dma.vmem_to_hbm [thread:$0]  %s771, 1024, %s769, %s740, 128, 128, 8
        $region60: #{custom_compose.1} parent=39 // pred_fallthru
          _
      $region40: #{custom_compose.1} parent=5 // pred_fallthru
        _
      %p777 = scmp.le.s32.totalorder 2, %s23
      // Predicated region
      $region61: #{custom_compose.1} parent=5 // pred_check
        %p778 = pneg %p777
      $region62: #{custom_compose.1} parent=5 // pred_check_branch
        %780 = sbr.rel (%p778) target = $region64
      $region63: #{custom_compose.1} parent=5 // pred_region
        %s781 = ssub.s32 %s23, 2
        // Predicated region
        $region65: #{custom_compose.1} parent=63 // pred_check
          %p782 = pneg %p162
        $region66: #{custom_compose.1} parent=63 // pred_check_branch
          %784 = sbr.rel (%p782) target = $region68
        $region67: #{custom_compose.1} parent=63 // pred_region
          %s785 = sand.u32 %s147, 1
          %s786 = scalar_lea.sflag [#allocation5], %s785
          %s787 = sand.u32 %s147, 1
          %s788 = smul.addr %s787, 128
          %s789 = scalar_lea.vmem [#allocation9], %s788
          %790 = dma.done %s786, 2048
        $region68: #{custom_compose.1} parent=63 // pred_fallthru
          _
        // Predicated region
        $region69: #{custom_compose.1} parent=63 // pred_check
          %p791 = pneg %p188
        $region70: #{custom_compose.1} parent=63 // pred_check_branch
          %793 = sbr.rel (%p791) target = $region72
        $region71: #{custom_compose.1} parent=63 // pred_region
          %s794 = sand.u32 %s173, 1
          %s795 = scalar_lea.sflag [#allocation11], %s794
          %s796 = sand.u32 %s173, 1
          %s797 = smul.addr %s796, 64
          %s798 = scalar_lea.vmem [#allocation10], %s797
          %799 = dma.done %s795, 1024
        $region72: #{custom_compose.1} parent=63 // pred_fallthru
          _
      $region64: #{custom_compose.1} parent=5 // pred_fallthru
        _
    $region6: #{custom_compose.1} parent=1 // loop_footer
      %s27 = sadd.s32 1, %s23
    $region7: #{custom_compose.1} parent=1 // loop_footer_branch
      %22 = sbr.rel target = $region3
    $region8: #{custom_compose.1} parent=1 // loop_exit
      _
    %800 = vsyncpa [#allocation4], 1
    %s801 = scalar_lea.sflag [#allocation4], 1
    %802 = vsyncpa %s801, 1
    %803 = vsyncpa [#allocation7], 1
    %804 = vsyncpa [#allocation5], 1
    %s805 = scalar_lea.sflag [#allocation5], 1
    %806 = vsyncpa %s805, 1
    %807 = vsyncpa [#allocation11], 1
    %s808 = scalar_lea.sflag [#allocation11], 1
    %809 = vsyncpa %s808, 1

</llo_original>
